<compile_context>
chip_gen: v5e
topology: v5e:2x2
jax: 0.10.0
libtpu: 0.0.40
codegen_flags: <defaults>
</compile_context>

<pallas_src>
import functools

import jax
import jax.numpy as jnp
from jax import lax
from jax.experimental import pallas as pl
from jax.experimental.pallas import tpu as pltpu


def _mlp_kernel(x_ref, w_ref, p_ref, o_ref, *, br: bool, eps: float):
    # x: (n, in_ch)   w: (tn, in_ch) native PyTorch layout   p: (3, tn)
    x = x_ref[...]
    w = w_ref[...]

    # Linear: contract in_ch of x with in_ch of W -> (n, tn) f32 on the MXU.
    y = lax.dot_general(
        x, w,
        dimension_numbers=(((1,), (1,)), ((), ())),
        preferred_element_type=jnp.float32,
    )

    params = p_ref[...]            # (3, tn): [bias; gamma; beta]
    y = y + params[0:1, :]         # bias

    if br:
        # BatchNorm1d in training mode: per-feature stats over the batch axis.
        # The full batch is resident in this block, so stats are exact.
        n = x_ref.shape[0]
        inv_n = 1.0 / n
        mean = jnp.sum(y, axis=0, keepdims=True) * inv_n          # XLU reduce
        centered = y - mean
        var = jnp.sum(centered * centered, axis=0, keepdims=True) * inv_n
        y = centered * lax.rsqrt(var + eps)                        # EUP rsqrt
        y = y * params[1:2, :] + params[2:3, :]                    # gamma, beta
        y = jnp.maximum(y, 0.0)                                    # ReLU

    o_ref[...] = y.astype(o_ref.dtype)


def mlp_forward(x, weight, bias, gamma, beta, *, br=True, eps=1e-5, tn=None):
    """Pallas TPU forward of the PyTorch `mlp` module.

    x:      (N, in_ch)        float32
    weight: (out_ch, in_ch)   PyTorch Linear layout (NOT transposed)
    bias:   (out_ch,)
    gamma:  (out_ch,)         BatchNorm1d weight
    beta:   (out_ch,)         BatchNorm1d bias
    """
    n, in_ch = x.shape
    out_ch = weight.shape[0]

    # Pad out_ch to a multiple of 128 for lane-dense stores / clean tiling.
    out_ch_p = pl.cdiv(out_ch, 128) * 128
    pad = out_ch_p - out_ch
    if pad:
        weight = jnp.pad(weight, ((0, pad), (0, 0)))
        bias = jnp.pad(bias, (0, pad))
        gamma = jnp.pad(gamma, (0, pad))
        beta = jnp.pad(beta, (0, pad))

    # Pack the three per-feature vectors into one (3, out_ch_p) slab.
    params = jnp.stack([bias, gamma, beta], axis=0)

    # Output-feature tile: largest of 512/256/128 that divides out_ch_p.
    if tn is None:
        tn = 128
        for cand in (512, 256):
            if out_ch_p % cand == 0:
                tn = cand
                break
    grid = (out_ch_p // tn,)

    kernel = functools.partial(_mlp_kernel, br=br, eps=eps)

    out_p = pl.pallas_call(
        kernel,
        out_shape=jax.ShapeDtypeStruct((n, out_ch_p), x.dtype),
        grid=grid,
        in_specs=[
            pl.BlockSpec((n, in_ch), lambda j: (0, 0)),   # x: resident, full batch
            pl.BlockSpec((tn, in_ch), lambda j: (j, 0)),  # W: native-layout tile
            pl.BlockSpec((3, tn), lambda j: (0, j)),      # packed bias/gamma/beta
        ],
        out_specs=pl.BlockSpec((n, tn), lambda j: (0, j)),
        compiler_params=pltpu.CompilerParams(
            dimension_semantics=("parallel",),
        ),
    )(x, weight, params)

    return out_p[:, :out_ch]


if __name__ == "__main__":
    # Small shapes consistent with the module: batch=8, in_ch=32, out_ch=64.
    N, IN_CH, OUT_CH = 8, 32, 64

    key = jax.random.PRNGKey(0)
    kx, kw, kb = jax.random.split(key, 3)

    x = jax.random.normal(kx, (N, IN_CH), dtype=jnp.float32)

    # Deterministic parameter init (PyTorch Linear-like uniform range).
    bound = 1.0 / (IN_CH ** 0.5)
    weight = jax.random.uniform(kw, (OUT_CH, IN_CH), jnp.float32, -bound, bound)
    bias = jax.random.uniform(kb, (OUT_CH,), jnp.float32, -bound, bound)
    gamma = jnp.ones((OUT_CH,), jnp.float32)   # BatchNorm1d default weight
    beta = jnp.zeros((OUT_CH,), jnp.float32)   # BatchNorm1d default bias

    out = mlp_forward(x, weight, bias, gamma, beta, br=True)
    out = jax.block_until_ready(out)

    # Pure-JAX reference (training-mode BN, biased variance).
    y_ref = x @ weight.T + bias
    mean = y_ref.mean(axis=0, keepdims=True)
    var = ((y_ref - mean) ** 2).mean(axis=0, keepdims=True)
    y_ref = (y_ref - mean) / jnp.sqrt(var + 1e-5) * gamma + beta
    y_ref = jnp.maximum(y_ref, 0.0)

    assert out.shape == (N, OUT_CH)
    assert jnp.allclose(out, y_ref, atol=1e-4, rtol=1e-4)

    # Also exercise the br=False (pure Linear) path.
    out_lin = jax.block_until_ready(
        mlp_forward(x, weight, bias, gamma, beta, br=False))
    assert jnp.allclose(out_lin, x @ weight.T + bias, atol=1e-4, rtol=1e-4)

    print("KERNEL_OK")
</pallas_src>

<mosaic_0001>
module attributes {stable_mosaic.version = 11 : i64} {
  func.func @_mlp_kernel(%arg0: i32, %arg1: memref<8x32xf32, #tpu.memory_space<vmem>>, %arg2: memref<128x32xf32, #tpu.memory_space<vmem>>, %arg3: memref<3x128xf32, #tpu.memory_space<vmem>>, %arg4: memref<8x128xf32, #tpu.memory_space<vmem>>) attributes {dimension_semantics = [#tpu.dimension_semantics<parallel>], iteration_bounds = array<i64: 1>, scalar_prefetch = 0 : i64, scratch_operands = 0 : i64, tpu.core_type = #tpu.core_type<tc>, window_params = [{pipeline_mode = #tpu.pipeline_mode<synchronous>, transform_indices = @transform_0, window_bounds = array<i64: 8, 32>}, {transform_indices = @transform_1, window_bounds = array<i64: 128, 32>}, {transform_indices = @transform_2, window_bounds = array<i64: 3, 128>}, {transform_indices = @transform_3, window_bounds = array<i64: 8, 128>}]} {
    %c0 = arith.constant 0 : index
    %c0_0 = arith.constant 0 : index
    %0 = vector.load %arg1[%c0, %c0_0] : memref<8x32xf32, #tpu.memory_space<vmem>>, vector<8x32xf32>
    %c0_1 = arith.constant 0 : index
    %c0_2 = arith.constant 0 : index
    %1 = vector.load %arg2[%c0_1, %c0_2] : memref<128x32xf32, #tpu.memory_space<vmem>>, vector<128x32xf32>
    %cst = arith.constant dense<0.000000e+00> : vector<8x128xf32>
    %2 = tpu.matmul %0, %1, %cst {dimension_numbers = #tpu.dot_dimension_numbers<[1], [1], [0], [0], [0, 0, 1, 0], [], []>} : vector<8x32xf32>, vector<128x32xf32>, vector<8x128xf32> -> vector<8x128xf32>
    %c0_3 = arith.constant 0 : index
    %c0_4 = arith.constant 0 : index
    %3 = vector.load %arg3[%c0_3, %c0_4] : memref<3x128xf32, #tpu.memory_space<vmem>>, vector<3x128xf32>
    %4 = vector.extract_strided_slice %3 {offsets = [0, 0], sizes = [1, 128], strides = [1, 1]} : vector<3x128xf32> to vector<1x128xf32>
    %5 = vector.broadcast %4 : vector<1x128xf32> to vector<8x128xf32>
    %6 = arith.addf %2, %5 : vector<8x128xf32>
    %cst_5 = arith.constant dense<0.000000e+00> : vector<128xf32>
    %7 = vector.multi_reduction <add>, %6, %cst_5 [0] : vector<8x128xf32> to vector<128xf32>
    %8 = vector.shape_cast %7 : vector<128xf32> to vector<1x128xf32>
    %cst_6 = arith.constant 1.250000e-01 : f32
    %9 = vector.broadcast %cst_6 : f32 to vector<1x128xf32>
    %10 = arith.mulf %8, %9 : vector<1x128xf32>
    %11 = vector.broadcast %10 : vector<1x128xf32> to vector<8x128xf32>
    %12 = arith.subf %6, %11 : vector<8x128xf32>
    %13 = arith.mulf %12, %12 : vector<8x128xf32>
    %cst_7 = arith.constant dense<0.000000e+00> : vector<128xf32>
    %14 = vector.multi_reduction <add>, %13, %cst_7 [0] : vector<8x128xf32> to vector<128xf32>
    %15 = vector.shape_cast %14 : vector<128xf32> to vector<1x128xf32>
    %cst_8 = arith.constant 1.250000e-01 : f32
    %16 = vector.broadcast %cst_8 : f32 to vector<1x128xf32>
    %17 = arith.mulf %15, %16 : vector<1x128xf32>
    %cst_9 = arith.constant 9.99999974E-6 : f32
    %18 = vector.broadcast %cst_9 : f32 to vector<1x128xf32>
    %19 = arith.addf %17, %18 : vector<1x128xf32>
    %20 = math.rsqrt %19 : vector<1x128xf32>
    %21 = vector.broadcast %20 : vector<1x128xf32> to vector<8x128xf32>
    %22 = arith.mulf %12, %21 : vector<8x128xf32>
    %23 = vector.extract_strided_slice %3 {offsets = [1, 0], sizes = [1, 128], strides = [1, 1]} : vector<3x128xf32> to vector<1x128xf32>
    %24 = vector.broadcast %23 : vector<1x128xf32> to vector<8x128xf32>
    %25 = arith.mulf %22, %24 : vector<8x128xf32>
    %26 = vector.extract_strided_slice %3 {offsets = [2, 0], sizes = [1, 128], strides = [1, 1]} : vector<3x128xf32> to vector<1x128xf32>
    %27 = vector.broadcast %26 : vector<1x128xf32> to vector<8x128xf32>
    %28 = arith.addf %25, %27 : vector<8x128xf32>
    %cst_10 = arith.constant 0.000000e+00 : f32
    %29 = vector.broadcast %cst_10 : f32 to vector<8x128xf32>
    %30 = arith.maximumf %28, %29 : vector<8x128xf32>
    %c0_11 = arith.constant 0 : index
    %c0_12 = arith.constant 0 : index
    %31 = vector.load %arg4[%c0_11, %c0_12] : memref<8x128xf32, #tpu.memory_space<vmem>>, vector<8x128xf32>
    tpu.vector_store %arg4[%c0_11, %c0_12], %30 {strides = array<i32>} : memref<8x128xf32, #tpu.memory_space<vmem>>, vector<8x128xf32>,
    return
  }
  func.func @transform_0(%arg0: i32) -> (i32, i32) {
    %c0_i32 = arith.constant 0 : i32
    %c0_i32_0 = arith.constant 0 : i32
    %c0_i32_1 = arith.constant 0 : i32
    return %c0_i32, %c0_i32_0 : i32, i32
  }
  func.func @transform_1(%arg0: i32) -> (i32, i32) {
    %c0_i32 = arith.constant 0 : i32
    %c0_i32_0 = arith.constant 0 : i32
    return %arg0, %c0_i32 : i32, i32
  }
  func.func @transform_2(%arg0: i32) -> (i32, i32) {
    %c0_i32 = arith.constant 0 : i32
    %c0_i32_0 = arith.constant 0 : i32
    return %c0_i32, %arg0 : i32, i32
  }
  func.func @transform_3(%arg0: i32) -> (i32, i32) {
    %c0_i32 = arith.constant 0 : i32
    %c0_i32_0 = arith.constant 0 : i32
    return %c0_i32, %arg0 : i32, i32
  }
}

</mosaic_0001>

<llo_original>
// kernel: tpu_custom_call.1
$region0: #{tpu_custom_call.1}
  #allocation0 [shape = 'u32[]', space=smem, size = 0x4, offset = 0x4, fixed_abs, tag = 'smem constant byte address 0x4 - core index']
  #allocation1 [shape = 'u32[72,128]{1,0:T(1,128)}', space=vmem, size = 0x9000, scoped, tag = 'internal scratch']
  %s0 = inlined_call_operand.vmem [shape: f32[8,32], index: 0, kind: input, shape index: {}]
  %s1 = inlined_call_operand.vmem [shape: f32[128,32], index: 1, kind: input, shape index: {}]
  %s2 = inlined_call_operand.vmem [shape: f32[3,128], index: 2, kind: input, shape index: {}]
  %s3 = inlined_call_operand.hbm [shape: f32[8,128], index: 3, kind: output, shape index: {}]
  %s4 = sld [smem:[#allocation0]]
  $region22: #{tpu_custom_call.1} parent=0
    _
  %s6 = ssub.s32 1, %s4
  %s7 = scalar_select 0, %s6, %s4
  $region1: #{tpu_custom_call.1} parent=0
    #allocation2 [shape = 'u8[4096]{0}', space=vmem, size = 0x1000, scoped, tag = 'output window, operand 0, single buffered']
    #allocation3 [shape = 's32[1]{0}', space=sflag, size = 0x4, scoped, tag = 'scoped memory for tpu_custom_call.1']
    %8 = vsyncpa [#allocation3], 0
    // Predicated region
    $region2: #{tpu_custom_call.1} parent=1 // pred_check
      _
    $region3: #{tpu_custom_call.1} parent=1 // pred_check_branch
      %10 = sbr.rel (0) target = $region5
    $region4: #{tpu_custom_call.1} parent=1 // pred_region
      _
    $region5: #{tpu_custom_call.1} parent=1 // pred_fallthru
      _
    // Predicated region
    $region6: #{tpu_custom_call.1} parent=1 // pred_check
      _
    $region7: #{tpu_custom_call.1} parent=1 // pred_check_branch
      %12 = sbr.rel (0) target = $region9
    $region8: #{tpu_custom_call.1} parent=1 // pred_region
      _
    $region9: #{tpu_custom_call.1} parent=1 // pred_fallthru
      _
    // Predicated region
    $region10: #{tpu_custom_call.1} parent=1 // pred_check
      _
    $region11: #{tpu_custom_call.1} parent=1 // pred_check_branch
      %14 = sbr.rel (0) target = $region13
    $region12: #{tpu_custom_call.1} parent=1 // pred_region
      _
    $region13: #{tpu_custom_call.1} parent=1 // pred_fallthru
      _
    %v15 = vld [vmem:[%s0] sm:$0xff]
    %v16 = vld [vmem:[%s1] sm:$0xff]
    %v17 = vld [vmem:[%s1 + $0x8] sm:$0xff]
    %v18 = vld [vmem:[%s1 + $0x10] sm:$0xff]
    %v19 = vld [vmem:[%s1 + $0x18] sm:$0xff]
    %v20 = vld [vmem:[%s1 + $0x20] sm:$0xff]
    %v21 = vld [vmem:[%s1 + $0x28] sm:$0xff]
    %v22 = vld [vmem:[%s1 + $0x30] sm:$0xff]
    %v23 = vld [vmem:[%s1 + $0x38] sm:$0xff]
    %v24 = vld [vmem:[%s1 + $0x40] sm:$0xff]
    %v25 = vld [vmem:[%s1 + $0x48] sm:$0xff]
    %v26 = vld [vmem:[%s1 + $0x50] sm:$0xff]
    %v27 = vld [vmem:[%s1 + $0x58] sm:$0xff]
    %v28 = vld [vmem:[%s1 + $0x60] sm:$0xff]
    %v29 = vld [vmem:[%s1 + $0x68] sm:$0xff]
    %v30 = vld [vmem:[%s1 + $0x70] sm:$0xff]
    %v31 = vld [vmem:[%s1 + $0x78] sm:$0xff]
    %v32 = vld [vmem:[%s2] sm:$0x7]
    %v33 = vperm.slane %v32, 0
    %vm34 = vcmask 261120
    %v36 = vsel %vm34, %v15, 0
    %v39 = vsel %vm34, %v16, 0
    %v42 = vsel %vm34, %v17, 0
    %v45 = vsel %vm34, %v18, 0
    %v48 = vsel %vm34, %v19, 0
    %v51 = vsel %vm34, %v20, 0
    %v54 = vsel %vm34, %v21, 0
    %v57 = vsel %vm34, %v22, 0
    %v60 = vsel %vm34, %v23, 0
    %v63 = vsel %vm34, %v24, 0
    %v66 = vsel %vm34, %v25, 0
    %v69 = vsel %vm34, %v26, 0
    %v72 = vsel %vm34, %v27, 0
    %v75 = vsel %vm34, %v28, 0
    %v78 = vsel %vm34, %v29, 0
    %v81 = vsel %vm34, %v30, 0
    %v84 = vsel %vm34, %v31, 0
    %86 = vmatpush.xpose.msra.mxu0 %v84
    %87 = vmatpush.xpose.msra.mxu0 %v81
    %88 = vmatpush.xpose.msra.mxu0 %v78
    %89 = vmatpush.xpose.msra.mxu0 %v75
    %90 = vmatpush.xpose.msra.mxu0 %v72
    %91 = vmatpush.xpose.msra.mxu0 %v69
    %92 = vmatpush.xpose.msra.mxu0 %v66
    %93 = vmatpush.xpose.msra.mxu0 %v63
    %94 = vmatpush.xpose.msra.mxu0 %v60
    %95 = vmatpush.xpose.msra.mxu0 %v57
    %96 = vmatpush.xpose.msra.mxu0 %v54
    %97 = vmatpush.xpose.msra.mxu0 %v51
    %98 = vmatpush.xpose.msra.mxu0 %v48
    %99 = vmatpush.xpose.msra.mxu0 %v45
    %100 = vmatpush.xpose.msra.mxu0 %v42
    %101 = vmatpush.xpose.msra.mxu0 %v39
    %102 = vmatmul.f32.gmra.mxu0 %v36
    %v103 = vpop.f32.mrf.mxu0
    %v104 = vadd.f32 %v33, %v103
    %105 = vdwg.mxu0
    %v106 = vrot.slane %v104, 4
    %v107 = vadd.f32 %v104, %v106
    %v108 = vrot.slane %v107, 2
    %v109 = vadd.f32 %v107, %v108
    %v110 = vrot.slane %v109, 1
    %v111 = vadd.f32 %v109, %v110
    %v112 = vmul.f32 %v111, 0.125
    %v113 = vsub.f32 %v104, %v112
    %v114 = vmul.f32 %v113, %v113
    %v115 = vrot.slane %v114, 4
    %v116 = vadd.f32 %v114, %v115
    %v117 = vrot.slane %v116, 2
    %v118 = vadd.f32 %v116, %v117
    %v119 = vrot.slane %v118, 1
    %v120 = vadd.f32 %v118, %v119
    %v121 = vmul.f32 %v120, 0.125
    %v122 = vadd.f32 %v121, 1e-05
    %v123 = vrsqrt.pop %v122
    %v124 = vmul.f32 %v123, %v122
    %v125 = vmul.f32 %v124, %v123
    %v126 = vmul.f32 0.5, %v125
    %v127 = vsub.f32 1.5, %v126
    %v128 = vmul.f32 %v123, %v127
    %vm129 = vweird.f32 %v122
    %vm130 = vweird.f32 %v123
    %vm131 = vmor %vm129, %vm130
    %v132 = vsel %vm131, %v123, %v128
    %v133 = vmul.f32 %v113, %v132
    %v134 = vperm.slane %v32, 1
    %v135 = vmul.f32 %v133, %v134
    %v136 = vperm.slane %v32, 2
    %v137 = vadd.f32 %v135, %v136
    %v138 = vmax.f32 %v137, 0.0
    %139 = vst [vmem:[#allocation2] sm:$0xff] %v138
    // Predicated region
    $region14: #{tpu_custom_call.1} parent=1 // pred_check
      _
    $region15: #{tpu_custom_call.1} parent=1 // pred_check_branch
      %141 = sbr.rel (0) target = $region17
    $region16: #{tpu_custom_call.1} parent=1 // pred_region
      %143 = vsyncadd [#allocation3], 0
      %s145 = sshll.u32 [#allocation2], 4
      %s146 = int_to_ptr.vmem [resolvable:$true] %s145
      %s147 = sshll.u32 %s3, 4
      %s148 = int_to_ptr.hbm [resolvable:$true] %s147
      %150 = dma.vmem_to_hbm [thread:$0]  %s146, 128, %s148, [#allocation3]
    $region17: #{tpu_custom_call.1} parent=1 // pred_fallthru
      _
    // Predicated region
    $region18: #{tpu_custom_call.1} parent=1 // pred_check
      _
    $region19: #{tpu_custom_call.1} parent=1 // pred_check_branch
      %152 = sbr.rel (0) target = $region21
    $region20: #{tpu_custom_call.1} parent=1 // pred_region
      %154 = dma.done [#allocation3], 128
    $region21: #{tpu_custom_call.1} parent=1 // pred_fallthru
      _
    %155 = vsyncpa [#allocation3], 1

</llo_original>
